<compile_context>
chip_gen: v6e
topology: v6e:2x2x1
jax: 0.10.0
libtpu: 0.0.40
codegen_flags: <defaults>
</compile_context>

<pallas_src>
import jax
import jax.numpy as jnp
from jax.experimental import pallas as pl
from jax.experimental.pallas import tpu as pltpu

LANE = 128


def _round_up(a: int, b: int) -> int:
    return ((a + b - 1) // b) * b


def _inverse_kernel(x_ref, s_ref, o_ref):
    # (x / scale).reciprocal() == scale / x  (single rounding step).
    # s_ref block is (tr, 1); broadcast across the 128-lane axis happens in-vreg.
    # NOTE: do NOT switch to pl.reciprocal(approx=True) -- the kernel is
    # DMA/HBM-bound on every generation, the exact divide is free.
    # Out-of-bounds rows/lanes of a partial block may hold garbage and the
    # divide can produce inf/NaN there; those values are never written back
    # (masked stores) and TPUs have no FP traps, so this is harmless.
    o_ref[...] = s_ref[...] / x_ref[...]


def _chip_params():
    """Generation-aware (per-operand tile budget bytes, vmem limit, has 2 TCs)."""
    kind = ""
    try:
        kind = jax.devices()[0].device_kind.lower()
    except Exception:
        pass
    if "v7" in kind:
        # v7x: ~3.2 TB/s HBM per TC -> bigger tiles to amortize per-step
        # overhead; 64 MiB physical VMEM -> explicit 48 MiB scoped limit.
        return 6 << 20, 48 << 20, True
    if "v6" in kind:
        # v6e: 32 MiB default scoped VMEM comfortably holds 4 x ~4 MiB buffers.
        return 4 << 20, 32 << 20, False
    # v5e / v5p / v4 / unknown: conservative, fits the 16 MiB default scoped VMEM.
    return 2 << 20, None, False


def _scale_rows(scale: jax.Array, N: int, C: int, dtype) -> jax.Array:
    """Collapse a broadcastable scale into one value per (n, c) row."""
    s = jnp.asarray(scale, dtype)
    if s.ndim == 0:
        s = s.reshape(1, 1, 1, 1)
    elif s.ndim == 1:
        s = s.reshape(1, -1, 1, 1)
    elif s.ndim < 4:
        s = s.reshape((1,) * (4 - s.ndim) + s.shape)
    # TODO(synk): a scale with spatial extent (H/W dims != 1) would need a
    # full-broadcast streaming path; this layer is used per-channel/scalar.
    assert s.ndim == 4 and s.shape[2] == 1 and s.shape[3] == 1, (
        "scale must broadcast over the spatial dims")
    s = jnp.broadcast_to(s, (N, C, 1, 1))
    return s.reshape(N * C, 1)


def inverse_layer(x: jax.Array, scale: jax.Array) -> jax.Array:
    """Compute x.div(scale).reciprocal() for NCHW x and per-channel scale."""
    assert x.ndim == 4, "expected NCHW input"
    N, C, H, W = x.shape
    dtype = x.dtype
    itemsize = jnp.dtype(dtype).itemsize
    sub = max(8, 32 // itemsize)       # sublane packing (f32: 8, bf16: 16, i8: 32)

    rows, cols = N * C, H * W
    rows_al = _round_up(rows, sub)
    cols_pad = _round_up(cols, LANE)   # VMEM footprint of a full-width block

    x2 = x.reshape(rows, cols)                    # free (contiguous) reshape
    s_rows = _scale_rows(scale, N, C, dtype)      # (rows, 1), tiny

    budget, vmem_limit, two_cores = _chip_params()

    # --- tile selection ------------------------------------------------------
    # Per-operand budget counts the (tr, tc_pad) x tile plus the lane-padded
    # (tr, 128) scale buffer it drags along.
    if sub * (cols_pad + LANE) * itemsize <= budget:
        tc, tc_pad = cols, cols_pad    # full (unpadded) width: legal block dim
    else:
        # Large spatial size: tile the lane axis (multiple of 128) so the
        # double-buffered x + out footprint stays inside every gen's VMEM.
        tc = (budget // (sub * itemsize) - LANE) // LANE * LANE
        tc = max(1024, min(tc, cols_pad))
        tc_pad = tc

    tr = budget // ((tc_pad + LANE) * itemsize)
    tr = max(sub, min(rows_al, (tr // sub) * sub, 4096))
    tr = min(tr, rows)                 # block == full array dim is always legal

    n_row = pl.cdiv(rows, tr)
    n_col = pl.cdiv(cols, tc)

    # Only v7x has two TensorCores: make sure it gets >= 2 parallel grid steps.
    if two_cores and n_row * n_col == 1 and rows_al >= 2 * sub:
        tr = _round_up((rows_al + 1) // 2, sub)
        n_row = pl.cdiv(rows, tr)

    grid = (n_row, n_col)

    compiler_kwargs = dict(dimension_semantics=("parallel", "parallel"))
    if vmem_limit is not None:
        compiler_kwargs["vmem_limit_bytes"] = vmem_limit

    out2 = pl.pallas_call(
        _inverse_kernel,
        out_shape=jax.ShapeDtypeStruct((rows, cols), dtype),
        grid_spec=pltpu.PrefetchScalarGridSpec(
            num_scalar_prefetch=0,
            grid=grid,
            in_specs=[
                pl.BlockSpec((tr, tc), lambda i, j: (i, j)),
                # Per-row scale: block index is constant across the inner
                # (column) axis, so Pallas fetches it once per row tile.
                pl.BlockSpec((tr, 1), lambda i, j: (i, 0)),
            ],
            out_specs=pl.BlockSpec((tr, tc), lambda i, j: (i, j)),
        ),
        compiler_params=pltpu.CompilerParams(**compiler_kwargs),
    )(x2, s_rows)

    return out2.reshape(N, C, H, W)


if __name__ == "__main__":
    key = jax.random.PRNGKey(0)
    kx, ks = jax.random.split(key)

    # Small NCHW input consistent with the module.
    N, C, H, W = 2, 4, 16, 16
    # Keep x away from zero to avoid inf in the reciprocal.
    x = jax.random.uniform(kx, (N, C, H, W), dtype=jnp.float32, minval=0.5, maxval=2.0)
    scale = jax.random.uniform(ks, (1, C, 1, 1), dtype=jnp.float32, minval=0.5, maxval=1.5)

    out = inverse_layer(x, scale)
    jax.block_until_ready(out)
    ref = 1.0 / (x / scale)
    assert jnp.allclose(out, ref, rtol=1e-5, atol=1e-6), "mismatch vs reference"

    # Non-aligned shapes (rows % 8 != 0, cols % 128 != 0) exercise the
    # partial-block masking path (no jnp.pad / slice copies), plus a (C,) scale.
    x_odd = jax.random.uniform(kx, (2, 3, 7, 5), dtype=jnp.float32, minval=0.5, maxval=2.0)
    s_odd = jax.random.uniform(ks, (3,), dtype=jnp.float32, minval=0.5, maxval=1.5)
    out_odd = inverse_layer(x_odd, s_odd)
    jax.block_until_ready(out_odd)
    ref_odd = 1.0 / (x_odd / s_odd.reshape(1, 3, 1, 1))
    assert jnp.allclose(out_odd, ref_odd, rtol=1e-5, atol=1e-6), "mismatch vs reference (odd shapes)"

    print("KERNEL_OK")
</pallas_src>

<mosaic_0001>
module attributes {stable_mosaic.version = 11 : i64} {
  func.func @_inverse_kernel(%arg0: i32, %arg1: i32, %arg2: memref<8x256xf32, #tpu.memory_space<vmem>>, %arg3: memref<8x1xf32, #tpu.memory_space<vmem>>, %arg4: memref<8x256xf32, #tpu.memory_space<vmem>>) attributes {dimension_semantics = [#tpu.dimension_semantics<parallel>, #tpu.dimension_semantics<parallel>], iteration_bounds = array<i64: 1, 1>, scalar_prefetch = 0 : i64, scratch_operands = 0 : i64, tpu.core_type = #tpu.core_type<tc>, window_params = [{transform_indices = @transform_0, window_bounds = array<i64: 8, 256>}, {transform_indices = @transform_1, window_bounds = array<i64: 8, 1>}, {transform_indices = @transform_2, window_bounds = array<i64: 8, 256>}]} {
    %c0 = arith.constant 0 : index
    %c0_0 = arith.constant 0 : index
    %0 = vector.load %arg3[%c0, %c0_0] : memref<8x1xf32, #tpu.memory_space<vmem>>, vector<8x1xf32>
    %c0_1 = arith.constant 0 : index
    %c0_2 = arith.constant 0 : index
    %1 = vector.load %arg2[%c0_1, %c0_2] : memref<8x256xf32, #tpu.memory_space<vmem>>, vector<8x256xf32>
    %2 = vector.broadcast %0 : vector<8x1xf32> to vector<8x256xf32>
    %3 = arith.divf %2, %1 : vector<8x256xf32>
    %c0_3 = arith.constant 0 : index
    %c0_4 = arith.constant 0 : index
    %4 = vector.load %arg4[%c0_3, %c0_4] : memref<8x256xf32, #tpu.memory_space<vmem>>, vector<8x256xf32>
    tpu.vector_store %arg4[%c0_3, %c0_4], %3 {strides = array<i32>} : memref<8x256xf32, #tpu.memory_space<vmem>>, vector<8x256xf32>,
    return
  }
  func.func @transform_0(%arg0: i32, %arg1: i32) -> (i32, i32) {
    %c0_i32 = arith.constant 0 : i32
    return %arg0, %arg1 : i32, i32
  }
  func.func @transform_1(%arg0: i32, %arg1: i32) -> (i32, i32) {
    %c0_i32 = arith.constant 0 : i32
    %c0_i32_0 = arith.constant 0 : i32
    return %arg0, %c0_i32 : i32, i32
  }
  func.func @transform_2(%arg0: i32, %arg1: i32) -> (i32, i32) {
    %c0_i32 = arith.constant 0 : i32
    return %arg0, %arg1 : i32, i32
  }
}

</mosaic_0001>

<llo_original>
// kernel: tpu_custom_call.1
$region0: #{tpu_custom_call.1}
  #allocation0 [shape = 'u32[]', space=smem, size = 0x4, offset = 0x4, fixed_abs, tag = 'smem constant byte address 0x4 - core index']
  #allocation1 [shape = 'u32[144,128]{1,0:T(1,128)}', space=vmem, size = 0x12000, scoped, tag = 'internal scratch']
  %s0 = inlined_call_operand.hbm [shape: f32[8,256], index: 0, kind: input, shape index: {}]
  %s1 = inlined_call_operand.vmem [shape: f32[8,1], index: 1, kind: input, shape index: {}]
  %s2 = inlined_call_operand.hbm [shape: f32[8,256], index: 2, kind: output, shape index: {}]
  %s3 = sld [smem:[#allocation0]]
  $region22: #{tpu_custom_call.1} parent=0
    _
  %s5 = ssub.s32 1, %s3
  %s6 = scalar_select 0, %s5, %s3
  $region1: #{tpu_custom_call.1} parent=0
    #allocation2 [shape = 'u8[8192]{0}', space=vmem, size = 0x2000, scoped, tag = 'input window, operand 0, single buffered']
    #allocation3 [shape = 's32[1]{0}', space=sflag, size = 0x4, scoped, tag = 'scoped memory for tpu_custom_call.1']
    #allocation4 [shape = 's32[1]{0}', space=sflag, size = 0x4, scoped, tag = 'scoped memory for tpu_custom_call.1']
    #allocation5 [shape = 'u8[8192]{0}', space=vmem, size = 0x2000, scoped, tag = 'output window, operand 0, single buffered']
    %7 = vsyncpa [#allocation3], 0
    %8 = vsyncpa [#allocation4], 0
    // Predicated region
    $region2: #{tpu_custom_call.1} parent=1 // pred_check
      _
    $region3: #{tpu_custom_call.1} parent=1 // pred_check_branch
      %10 = sbr.rel (0) target = $region5
    $region4: #{tpu_custom_call.1} parent=1 // pred_region
      %s12 = ssub.s32 256, 256
      %13 = vsyncadd [#allocation3], %s12
      %s15 = sshll.u32 [#allocation2], 4
      %s16 = int_to_ptr.vmem [resolvable:$true] %s15
      %18 = dma.hbm_to_vmem [thread:$0]  %s0, 256, %s16, [#allocation3]
    $region5: #{tpu_custom_call.1} parent=1 // pred_fallthru
      _
    // Predicated region
    $region6: #{tpu_custom_call.1} parent=1 // pred_check
      _
    $region7: #{tpu_custom_call.1} parent=1 // pred_check_branch
      %20 = sbr.rel (0) target = $region9
    $region8: #{tpu_custom_call.1} parent=1 // pred_region
      _
    $region9: #{tpu_custom_call.1} parent=1 // pred_fallthru
      _
    // Predicated region
    $region10: #{tpu_custom_call.1} parent=1 // pred_check
      _
    $region11: #{tpu_custom_call.1} parent=1 // pred_check_branch
      %22 = sbr.rel (0) target = $region13
    $region12: #{tpu_custom_call.1} parent=1 // pred_region
      %23 = dma.done [#allocation3], 256
    $region13: #{tpu_custom_call.1} parent=1 // pred_fallthru
      _
    %v24 = vld [vmem:[%s1] sm:$0xff]
    %v25 = vld [vmem:[#allocation2] sm:$0xff]
    %v26 = vld [vmem:[#allocation2 + $0x8] sm:$0xff]
    %28 = vset.pattern.permute.xlu0 0
    %29 = vperm.xlu0 %28, %v24
    %v30 = vpop.permute.xlu0 %29
    %v32 = vrcp.pop %v25
    %v33 = vmul.f32 %v30, %v32
    %v34 = vrcp.pop %v26
    %v35 = vmul.f32 %v30, %v34
    %36 = vst [vmem:[#allocation5] sm:$0xff] %v33
    %37 = vst [vmem:[#allocation5 + $0x8] sm:$0xff] %v35
    // Predicated region
    $region14: #{tpu_custom_call.1} parent=1 // pred_check
      _
    $region15: #{tpu_custom_call.1} parent=1 // pred_check_branch
      %39 = sbr.rel (0) target = $region17
    $region16: #{tpu_custom_call.1} parent=1 // pred_region
      %s41 = ssub.s32 256, 256
      %42 = vsyncadd [#allocation4], %s41
      %s44 = sshll.u32 [#allocation5], 4
      %s45 = int_to_ptr.vmem [resolvable:$true] %s44
      %47 = dma.vmem_to_hbm [thread:$0]  %s45, 256, %s2, [#allocation4]
    $region17: #{tpu_custom_call.1} parent=1 // pred_fallthru
      _
    // Predicated region
    $region18: #{tpu_custom_call.1} parent=1 // pred_check
      _
    $region19: #{tpu_custom_call.1} parent=1 // pred_check_branch
      %49 = sbr.rel (0) target = $region21
    $region20: #{tpu_custom_call.1} parent=1 // pred_region
      %50 = dma.done [#allocation4], 256
    $region21: #{tpu_custom_call.1} parent=1 // pred_fallthru
      _
    %51 = vsyncpa [#allocation3], 1
    %52 = vsyncpa [#allocation4], 1

</llo_original>
